<compile_context>
chip_gen: v7x
topology: tpu7x:2x2x1
jax: 0.10.0
libtpu: 0.0.40
codegen_flags: <defaults>
</compile_context>

<pallas_src>
import jax
import jax.numpy as jnp
from jax.experimental import pallas as pl
from jax.experimental.pallas import tpu as pltpu


def _model_kernel(x_ref, o_ref):
    # x_ref: (TB, D) f32 input tile; o_ref: (TB, 2, D) output tile.
    x = x_ref[...]
    _, d = x.shape

    # Negate the first 3 flattened columns (the PyTorch view aliases x, so
    # both cat operands see the negation).  (1, d) mask row, broadcast at use.
    col = jax.lax.broadcasted_iota(jnp.int32, (1, d), 1)
    x_mod = jnp.where(col < 3, -x, x)

    # left  = tanh(tanh(x_mod))
    # right = tanh(tanh(tanh(relu(x_mod)))) = relu(tanh(left))
    #   (tanh is odd, monotone, tanh(0)=0  =>  tanh(relu(.)) == relu(tanh(.)))
    # => only 3 tanh per element instead of 5 on the single EUP slot.
    t1 = jnp.tanh(x_mod)
    left = jnp.tanh(t1)
    right = jnp.maximum(jnp.tanh(left), 0.0)

    o_ref[:, 0, :] = left
    o_ref[:, 1, :] = right


def _choose_tb(B, D):
    """Rows per grid step: multiple of 8, sized so double-buffered
    (input + output) tiles stay well under v7x's 64 MiB VMEM."""
    if B <= 8:
        return B
    max_rows = max(8, (512 * 1024) // max(D, 1))   # ~2 MiB f32 input tile
    tb = min(B, max_rows, 512)
    return max(8, (tb // 8) * 8)


def model_forward(x, tb=None):
    """x: (B, D) float32 with D >= 3  ->  (B, 2*D) float32."""
    B, D = x.shape
    if tb is None:
        tb = _choose_tb(B, D)
    grid = (pl.cdiv(B, tb),)

    out = pl.pallas_call(
        _model_kernel,
        out_shape=jax.ShapeDtypeStruct((B, 2, D), x.dtype),
        grid=grid,
        in_specs=[pl.BlockSpec((tb, D), lambda i: (i, 0))],
        out_specs=pl.BlockSpec((tb, 2, D), lambda i: (i, 0, 0)),
        compiler_params=pltpu.CompilerParams(
            dimension_semantics=("parallel",)),
    )(x)
    # Row-major collapse of (B, 2, D) -> (B, 2D) reproduces cat(dim=1) for free.
    return out.reshape(B, 2 * D)


def _reference(x):
    """Pure-JAX reference mirroring the literal PyTorch op order."""
    _, D = x.shape
    col = jnp.arange(D)[None, :]
    x_mod = jnp.where(col < 3, -x, x)
    y = jnp.tanh(jax.nn.relu(x_mod))
    cat = jnp.concatenate([x_mod, y], axis=1)
    return jnp.tanh(jnp.tanh(cat))


if __name__ == "__main__":
    key = jax.random.PRNGKey(0)
    k_small, k_big = jax.random.split(key)

    # Case 1: the module's literal workload, x = randn(2, 3, 4), flattened to
    # (2, 12) — the same storage the in-module view aliases.  Single-block path.
    x3 = jax.random.normal(k_small, (2, 3, 4), dtype=jnp.float32)
    x_small = x3.reshape(2, -1)                      # (2, 12)
    out_small = jax.block_until_ready(model_forward(x_small))
    assert out_small.shape == (2, 24)
    assert jnp.allclose(out_small, _reference(x_small), atol=1e-6, rtol=1e-6)

    # Case 2: a tile-friendly shape exercising the batched grid path
    # (4 grid steps, lane-dense D = 256).
    x_big = jax.random.normal(k_big, (64, 256), dtype=jnp.float32)
    out_big = jax.block_until_ready(model_forward(x_big, tb=16))
    assert out_big.shape == (64, 512)
    assert jnp.allclose(out_big, _reference(x_big), atol=1e-6, rtol=1e-6)

    print("KERNEL_OK")
</pallas_src>

<mosaic_0001>
module attributes {stable_mosaic.version = 11 : i64} {
  func.func @_model_kernel(%arg0: i32, %arg1: memref<2x12xf32, #tpu.memory_space<vmem>>, %arg2: memref<2x2x12xf32, #tpu.memory_space<vmem>>) attributes {dimension_semantics = [#tpu.dimension_semantics<parallel>], iteration_bounds = array<i64: 1>, scalar_prefetch = 0 : i64, scratch_operands = 0 : i64, tpu.core_type = #tpu.core_type<tc>, window_params = [{transform_indices = @transform_0, window_bounds = array<i64: 2, 12>}, {transform_indices = @transform_1, window_bounds = array<i64: 2, 2, 12>}]} {
    %c0 = arith.constant 0 : index
    %c0_0 = arith.constant 0 : index
    %0 = vector.load %arg1[%c0, %c0_0] : memref<2x12xf32, #tpu.memory_space<vmem>>, vector<2x12xf32>
    %1 = tpu.iota {dimensions = array<i32: 1>} : vector<1x12xi32>
    %c3_i32 = arith.constant 3 : i32
    %2 = vector.broadcast %c3_i32 : i32 to vector<1x12xi32>
    %3 = arith.cmpi slt, %1, %2 : vector<1x12xi32>
    %cst = arith.constant 0.000000e+00 : f32
    %4 = vector.broadcast %cst : f32 to vector<2x12xf32>
    %5 = arith.subf %4, %0 : vector<2x12xf32>
    %6 = vector.shape_cast %3 : vector<1x12xi1> to vector<1x12xi1>
    %7 = vector.broadcast %6 : vector<1x12xi1> to vector<2x12xi1>
    %8 = arith.select %7, %5, %0 : vector<2x12xi1>, vector<2x12xf32>
    %9 = math.tanh %8 : vector<2x12xf32>
    %10 = math.tanh %9 : vector<2x12xf32>
    %11 = math.tanh %10 : vector<2x12xf32>
    %cst_1 = arith.constant 0.000000e+00 : f32
    %12 = vector.broadcast %cst_1 : f32 to vector<2x12xf32>
    %13 = arith.maximumf %11, %12 : vector<2x12xf32>
    %c0_2 = arith.constant 0 : index
    %c0_3 = arith.constant 0 : index
    %c0_4 = arith.constant 0 : index
    %14 = vector.load %arg2[%c0_2, %c0_3, %c0_4] : memref<2x2x12xf32, #tpu.memory_space<vmem>>, vector<2x1x12xf32>
    %15 = vector.shape_cast %14 : vector<2x1x12xf32> to vector<2x12xf32>
    %16 = vector.shape_cast %10 : vector<2x12xf32> to vector<2x1x12xf32>
    tpu.vector_store %arg2[%c0_2, %c0_3, %c0_4], %16 {strides = array<i32>} : memref<2x2x12xf32, #tpu.memory_space<vmem>>, vector<2x1x12xf32>,
    %c0_5 = arith.constant 0 : index
    %c1 = arith.constant 1 : index
    %c0_6 = arith.constant 0 : index
    %17 = vector.load %arg2[%c0_5, %c1, %c0_6] : memref<2x2x12xf32, #tpu.memory_space<vmem>>, vector<2x1x12xf32>
    %18 = vector.shape_cast %17 : vector<2x1x12xf32> to vector<2x12xf32>
    %19 = vector.shape_cast %13 : vector<2x12xf32> to vector<2x1x12xf32>
    tpu.vector_store %arg2[%c0_5, %c1, %c0_6], %19 {strides = array<i32>} : memref<2x2x12xf32, #tpu.memory_space<vmem>>, vector<2x1x12xf32>,
    return
  }
  func.func @transform_0(%arg0: i32) -> (i32, i32) {
    %c0_i32 = arith.constant 0 : i32
    %c0_i32_0 = arith.constant 0 : i32
    return %arg0, %c0_i32 : i32, i32
  }
  func.func @transform_1(%arg0: i32) -> (i32, i32, i32) {
    %c0_i32 = arith.constant 0 : i32
    %c0_i32_0 = arith.constant 0 : i32
    %c0_i32_1 = arith.constant 0 : i32
    return %arg0, %c0_i32, %c0_i32_0 : i32, i32, i32
  }
}

</mosaic_0001>

<llo_original>
// kernel: tpu_custom_call.1
$region0: #{tpu_custom_call.1}
  #allocation0 [shape = 'u32[]', space=smem, size = 0x4, offset = 0x4, fixed_abs, tag = 'smem constant byte address 0x4 - core index']
  #allocation1 [shape = 'u32[144,128]{1,0:T(1,128)}', space=vmem, size = 0x12000, scoped, tag = 'internal scratch']
  %s0 = inlined_call_operand.hbm [shape: f32[2,12], index: 0, kind: input, shape index: {}]
  %s1 = inlined_call_operand.hbm [shape: f32[2,2,12], index: 1, kind: output, shape index: {}]
  %s2 = sld [smem:[#allocation0]]
  $region18: #{tpu_custom_call.1} parent=0
    _
  %s4 = ssub.s32 1, %s2
  %s5 = scalar_select 0, %s4, %s2
  $region1: #{tpu_custom_call.1} parent=0
    #allocation2 [shape = 'u8[1024]{0}', space=vmem, size = 0x400, scoped, tag = 'input window, operand 0, single buffered']
    #allocation3 [shape = 's32[1]{0}', space=sflag, size = 0x4, scoped, tag = 'scoped memory for tpu_custom_call.1']
    #allocation4 [shape = 's32[1]{0}', space=sflag, size = 0x4, scoped, tag = 'scoped memory for tpu_custom_call.1']
    #allocation5 [shape = 'u8[2048]{0}', space=vmem, size = 0x800, scoped, tag = 'output window, operand 0, single buffered']
    %6 = vsyncpa [#allocation3], 0
    %7 = vsyncpa [#allocation4], 0
    // Predicated region
    $region2: #{tpu_custom_call.1} parent=1 // pred_check
      _
    $region3: #{tpu_custom_call.1} parent=1 // pred_check_branch
      %9 = sbr.rel (0) target = $region5
    $region4: #{tpu_custom_call.1} parent=1 // pred_region
      %s11 = ssub.s32 32, 32
      %12 = vsyncadd [#allocation3], %s11
      %s14 = sshll.u32 [#allocation2], 4
      %s15 = int_to_ptr.vmem [resolvable:$true] %s14
      %17 = dma.hbm_to_vmem [thread:$0]  %s0, 32, %s15, [#allocation3]
    $region5: #{tpu_custom_call.1} parent=1 // pred_fallthru
      _
    // Predicated region
    $region6: #{tpu_custom_call.1} parent=1 // pred_check
      _
    $region7: #{tpu_custom_call.1} parent=1 // pred_check_branch
      %19 = sbr.rel (0) target = $region9
    $region8: #{tpu_custom_call.1} parent=1 // pred_region
      %20 = dma.done [#allocation3], 32
    $region9: #{tpu_custom_call.1} parent=1 // pred_fallthru
      _
    %v21 = vld [vmem:[#allocation2] sm:$0x3]
    %v22 = vlaneseq
    %v23 = vand.u32 %v22, 127
    %vm24 = vcmp.lt.s32.totalorder %v23, 3
    %v25 = vsub.f32 0.0, %v21
    %v26 = vsel %vm24, 1, 0
    %vm27 = vcmp.eq.s32.totalorder %v26, 1
    %v28 = vsel %vm27, %v25, %v21
    %v29 = vtanh.pop %v28
    %v30 = vtanh.pop %v29
    %v31 = vtanh.pop %v30
    %v32 = vmax.f32 %v31, 0.0
    %v35 = vunpack.c.l.s4 1966171168
    %v36 = vunpack.c.0.s8 %v35
    %v37 = vlaneseq
    %v38 = vshrl.u32 %v37, 7
    %v39 = vsub.s32 %v36, %v38
    %v40 = vrot.slane %v30, %v39
    %v41 = vcombine.high %v40, %v40
    %v43 = vunpack.c.l.s4 1966171168
    %v44 = vunpack.c.0.s8 %v43
    %v45 = vlaneseq
    %v46 = vshrl.u32 %v45, 7
    %v47 = vsub.s32 %v44, %v46
    %v48 = vrot.slane %v40, %v47
    %v50 = vunpack.c.l.s4 1966171168
    %v51 = vunpack.c.0.s8 %v50
    %v52 = vlaneseq
    %v53 = vshrl.u32 %v52, 7
    %v54 = vsub.s32 %v51, %v53
    %v55 = vrot.slane %v41, %v54
    %vm58 = vcmask 90112
    %59 = vst.msk [vmem:[#allocation5] sm:$0x1] %vm58, %v48
    %60 = vst.msk [vmem:[#allocation5 + $0x2] sm:$0x1] %vm58, %v55
    %v63 = vunpack.c.l.s4 1966171168
    %v64 = vunpack.c.0.s8 %v63
    %v65 = vlaneseq
    %v66 = vshrl.u32 %v65, 7
    %v67 = vsub.s32 %v64, %v66
    %v68 = vrot.slane %v32, %v67
    %v69 = vcombine.high %v68, %v68
    %v71 = vunpack.c.l.s4 1966171168
    %v72 = vunpack.c.0.s8 %v71
    %v73 = vlaneseq
    %v74 = vshrl.u32 %v73, 7
    %v75 = vsub.s32 %v72, %v74
    %v76 = vrot.slane %v68, %v75
    %v78 = vunpack.c.l.s4 1966171168
    %v79 = vunpack.c.0.s8 %v78
    %v80 = vlaneseq
    %v81 = vshrl.u32 %v80, 7
    %v82 = vsub.s32 %v79, %v81
    %v83 = vrot.slane %v69, %v82
    %86 = vst.msk [vmem:[#allocation5 + $0x1] sm:$0x1] %vm58, %v76
    %87 = vst.msk [vmem:[#allocation5 + $0x3] sm:$0x1] %vm58, %v83
    // Predicated region
    $region10: #{tpu_custom_call.1} parent=1 // pred_check
      _
    $region11: #{tpu_custom_call.1} parent=1 // pred_check_branch
      %89 = sbr.rel (0) target = $region13
    $region12: #{tpu_custom_call.1} parent=1 // pred_region
      %s91 = ssub.s32 64, 64
      %92 = vsyncadd [#allocation4], %s91
      %s93 = sshll.u32 [#allocation5], 4
      %s94 = int_to_ptr.vmem [resolvable:$true] %s93
      %99 = dma.vmem_to_hbm [thread:$0]  %s94, 64, %s1, [#allocation4], 32, 32, 2
    $region13: #{tpu_custom_call.1} parent=1 // pred_fallthru
      _
    // Predicated region
    $region14: #{tpu_custom_call.1} parent=1 // pred_check
      _
    $region15: #{tpu_custom_call.1} parent=1 // pred_check_branch
      %101 = sbr.rel (0) target = $region17
    $region16: #{tpu_custom_call.1} parent=1 // pred_region
      %102 = dma.done [#allocation4], 64
    $region17: #{tpu_custom_call.1} parent=1 // pred_fallthru
      _
    %103 = vsyncpa [#allocation3], 1
    %104 = vsyncpa [#allocation4], 1

</llo_original>
